<compile_context>
chip_gen: v6e
topology: v6e:2x2x1
jax: 0.10.0
libtpu: 0.0.40
codegen_flags: <defaults>
</compile_context>

<pallas_src>
import functools
import math

import jax
import jax.numpy as jnp
from jax.experimental import pallas as pl
from jax.experimental.pallas import tpu as pltpu


# --------------------------------------------------------------------------- helpers
def _round_up(a, b):
    return ((a + b - 1) // b) * b


def _row_tile(n, tm):
    """Row tile (multiple of 8); prefer >=2 grid programs so v7x megacore is used."""
    n8 = _round_up(max(n, 1), 8)
    t = min(tm, n8)
    if (n8 // t) < 2 and n8 >= 16:
        t = _round_up(pl.cdiv(n8, 2), 8)
    return t, _round_up(n8, t)


def _pad_cols(x, cols):
    return x if x.shape[-1] == cols else jnp.pad(x, ((0, 0), (0, cols - x.shape[-1])))


def _pad_rows(x, rows):
    return x if x.shape[0] == rows else jnp.pad(x, ((0, rows - x.shape[0]), (0, 0)))


def _layernorm_rows(s, d_real, eps, g, b):
    """LayerNorm over the first d_real columns of s (padded cols of s are zero).
    Output padded columns come out as exactly 0 (gamma/beta are zero-padded)."""
    mu = jnp.sum(s, axis=-1, keepdims=True) * (1.0 / d_real)
    lane = jax.lax.broadcasted_iota(jnp.int32, s.shape, 1)
    c = jnp.where(lane < d_real, s - mu, 0.0)
    var = jnp.sum(c * c, axis=-1, keepdims=True) * (1.0 / d_real)
    return c * jax.lax.rsqrt(var + eps) * g + b


# --------------------------------------------------------------------------- kernels
def fused_linear_kernel(x_ref, w_ref, *o_refs):
    # x: (tm, din_p), w: (din_p, sum(dout_i)); outputs split along the lane dim.
    y = jnp.dot(x_ref[...], w_ref[...], preferred_element_type=jnp.float32)
    off = 0
    for o_ref in o_refs:
        d = o_ref.shape[-1]
        o_ref[...] = y[:, off:off + d].astype(o_ref.dtype)
        off += d


def attn_kernel(vl_ref, q_ref, qb_ref, k_ref, v_ref, o_ref, *, num_heads, dh, scale):
    # Head-packed attention for one batch element: q (1,Tq,Dp), k/v (1,Tk,Dp), qb (1,1,Dp).
    # vl_ref: SMEM (B,) int32 valid lengths (shared by all heads of a batch).
    b = pl.program_id(0)
    vl = vl_ref[b]
    q = q_ref[0] + qb_ref[0]              # intent projection folded into Q (broadcast over Tq)
    k = k_ref[0]
    v = v_ref[0]
    # lane-dense output block; zero once so padded feature columns stay 0
    o_ref[...] = jnp.zeros_like(o_ref)
    # TODO(synk): add a KV-tile grid axis with online softmax for long encoder contexts.
    for h in range(num_heads):
        lo, hi = h * dh, (h + 1) * dh
        qh, kh, vh = q[:, lo:hi], k[:, lo:hi], v[:, lo:hi]
        # matmuls in input dtype, f32 accumulation (fast MXU path when fed bf16)
        s = jax.lax.dot_general(qh, kh, (((1,), (1,)), ((), ())),
                                preferred_element_type=jnp.float32) * scale
        col = jax.lax.broadcasted_iota(jnp.int32, s.shape, 1)
        s = jnp.where(col < vl, s, -1e6)                 # masked_softmax: X[~mask] = -1e6
        s = s - jnp.max(s, axis=-1, keepdims=True)
        p = jnp.exp(s)
        inv = pl.reciprocal(jnp.sum(p, axis=-1, keepdims=True), approx=True)  # EUP slot
        p = (p * inv).astype(vh.dtype)
        oh = jax.lax.dot_general(p, vh, (((1,), (0,)), ((), ())),
                                 preferred_element_type=jnp.float32)
        o_ref[0, :, lo:hi] = oh.astype(o_ref.dtype)


def wo_addnorm_kernel(a_ref, w_ref, res_ref, g_ref, b_ref, o_ref, *, d_real, eps):
    # LayerNorm(res + a @ W_o)   (self-attention epilogue, LN1 fused)
    y = jnp.dot(a_ref[...], w_ref[...], preferred_element_type=jnp.float32)
    s = res_ref[...].astype(jnp.float32) + y
    out = _layernorm_rows(s, d_real, eps, g_ref[...].astype(jnp.float32),
                          b_ref[...].astype(jnp.float32))
    o_ref[...] = out.astype(o_ref.dtype)


def cross_merge_kernel(ac_ref, ae_ref, wc_ref, we_ref, ga_ref, gb_ref,
                       res_ref, g_ref, b_ref, o_ref, *, d_real, eps):
    # y2t = ac @ Wo_code ; y2e = ae @ Wo_ex ; gate = sigmoid([y2t,y2e] @ Wg)
    # out = LayerNorm(res + gate*y2t + (1-gate)*y2e)     (LN2 + gate fused)
    yc = jnp.dot(ac_ref[...], wc_ref[...], preferred_element_type=jnp.float32)
    ye = jnp.dot(ae_ref[...], we_ref[...], preferred_element_type=jnp.float32)
    logit = (jnp.sum(yc * ga_ref[...].astype(jnp.float32), axis=-1, keepdims=True) +
             jnp.sum(ye * gb_ref[...].astype(jnp.float32), axis=-1, keepdims=True))
    gate = jax.nn.sigmoid(logit)
    y2 = gate * yc + (1.0 - gate) * ye
    s = res_ref[...].astype(jnp.float32) + y2
    out = _layernorm_rows(s, d_real, eps, g_ref[...].astype(jnp.float32),
                          b_ref[...].astype(jnp.float32))
    o_ref[...] = out.astype(o_ref.dtype)


def ffn_addnorm_kernel(z_ref, w1_ref, b1_ref, w2_ref, b2_ref, g_ref, b_ref,
                       o_ref, acc_ref, *, d_real, eps):
    # grid = (row_tiles, d_ff_tiles); reduction (k) axis last; LN3 fused into finalize.
    k = pl.program_id(1)

    @pl.when(k == 0)
    def _init():
        acc_ref[...] = jnp.zeros_like(acc_ref)

    h = jnp.dot(z_ref[...], w1_ref[...], preferred_element_type=jnp.float32)
    h = jnp.maximum(h + b1_ref[...].astype(jnp.float32), 0.0)
    # dropout: identity (eval mode)
    acc_ref[...] += jnp.dot(h.astype(w2_ref.dtype), w2_ref[...],
                            preferred_element_type=jnp.float32)

    @pl.when(k == pl.num_programs(1) - 1)
    def _finalize():
        s = (z_ref[...].astype(jnp.float32) + acc_ref[...]
             + b2_ref[...].astype(jnp.float32))
        out = _layernorm_rows(s, d_real, eps, g_ref[...].astype(jnp.float32),
                              b_ref[...].astype(jnp.float32))
        o_ref[...] = out.astype(o_ref.dtype)


# --------------------------------------------------------------------------- wrappers
def fused_linear(x2, w, out_dims, *, tm=256):
    """x2 @ w with the pre-concatenated weight split into len(out_dims) outputs (no bias)."""
    n, din = x2.shape
    dout = int(sum(out_dims))
    assert w.shape == (din, dout)
    tm_eff, n_pad = _row_tile(n, tm)
    xp = _pad_rows(x2, n_pad)
    itemsize = xp.dtype.itemsize
    cost = pl.CostEstimate(
        flops=int(2 * n_pad * din * dout), transcendentals=0,
        bytes_accessed=int(itemsize * (n_pad * din + din * dout + n_pad * dout)))
    outs = pl.pallas_call(
        fused_linear_kernel,
        out_shape=tuple(jax.ShapeDtypeStruct((n_pad, d), x2.dtype) for d in out_dims),
        grid_spec=pltpu.PrefetchScalarGridSpec(
            num_scalar_prefetch=0,
            grid=(n_pad // tm_eff,),
            in_specs=[pl.BlockSpec((tm_eff, din), lambda i: (i, 0)),
                      pl.BlockSpec((din, dout), lambda i: (0, 0))],
            out_specs=tuple(pl.BlockSpec((tm_eff, d), lambda i: (i, 0))
                            for d in out_dims)),
        compiler_params=pltpu.CompilerParams(dimension_semantics=("parallel",)),
        cost_estimate=cost,
    )(xp, w)
    if n_pad == n:
        return outs
    return tuple(o[:n] for o in outs)


def pallas_attention(q, qb, k, v, valid_lens, *, num_heads, dh):
    """Head-packed attention; grid over batch (parallel), lane-dense (.., D_pad) blocks."""
    B, Tq, dmp = q.shape
    Tk = k.shape[1]
    scale = 1.0 / math.sqrt(dh)
    kern = functools.partial(attn_kernel, num_heads=num_heads, dh=dh, scale=scale)
    return pl.pallas_call(
        kern,
        out_shape=jax.ShapeDtypeStruct((B, Tq, dmp), q.dtype),
        grid_spec=pltpu.PrefetchScalarGridSpec(
            num_scalar_prefetch=1,                        # per-batch valid lens -> SMEM
            grid=(B,),
            in_specs=[pl.BlockSpec((1, Tq, dmp), lambda b, vl: (b, 0, 0)),
                      pl.BlockSpec((1, 1, dmp), lambda b, vl: (b, 0, 0)),
                      pl.BlockSpec((1, Tk, dmp), lambda b, vl: (b, 0, 0)),
                      pl.BlockSpec((1, Tk, dmp), lambda b, vl: (b, 0, 0))],
            out_specs=pl.BlockSpec((1, Tq, dmp), lambda b, vl: (b, 0, 0))),
        compiler_params=pltpu.CompilerParams(dimension_semantics=("parallel",)),
    )(valid_lens, q, qb, k, v)


def wo_addnorm(a2, wo, res2, gamma, beta, *, d_real, eps=1e-5, tm=256):
    n, dmp = a2.shape
    tm_eff, n_pad = _row_tile(n, tm)
    ap, rp = _pad_rows(a2, n_pad), _pad_rows(res2, n_pad)
    itemsize = ap.dtype.itemsize
    cost = pl.CostEstimate(
        flops=int(2 * n_pad * dmp * dmp + 8 * n_pad * dmp), transcendentals=0,
        bytes_accessed=int(itemsize * (3 * n_pad * dmp + dmp * dmp)))
    out = pl.pallas_call(
        functools.partial(wo_addnorm_kernel, d_real=d_real, eps=eps),
        out_shape=jax.ShapeDtypeStruct((n_pad, dmp), a2.dtype),
        grid_spec=pltpu.PrefetchScalarGridSpec(
            num_scalar_prefetch=0, grid=(n_pad // tm_eff,),
            in_specs=[pl.BlockSpec((tm_eff, dmp), lambda i: (i, 0)),
                      pl.BlockSpec((dmp, dmp), lambda i: (0, 0)),
                      pl.BlockSpec((tm_eff, dmp), lambda i: (i, 0)),
                      pl.BlockSpec((1, dmp), lambda i: (0, 0)),
                      pl.BlockSpec((1, dmp), lambda i: (0, 0))],
            out_specs=pl.BlockSpec((tm_eff, dmp), lambda i: (i, 0))),
        compiler_params=pltpu.CompilerParams(dimension_semantics=("parallel",)),
        cost_estimate=cost,
    )(ap, wo, rp, gamma, beta)
    return out if n_pad == n else out[:n]


def cross_merge(ac2, ae2, wo_c, wo_e, gate_a, gate_b, res2, gamma, beta, *,
                d_real, eps=1e-5, tm=256):
    n, dmp = ac2.shape
    tm_eff, n_pad = _row_tile(n, tm)
    acp, aep, rp = _pad_rows(ac2, n_pad), _pad_rows(ae2, n_pad), _pad_rows(res2, n_pad)
    itemsize = acp.dtype.itemsize
    cost = pl.CostEstimate(
        flops=int(4 * n_pad * dmp * dmp + 16 * n_pad * dmp), transcendentals=int(n_pad),
        bytes_accessed=int(itemsize * (4 * n_pad * dmp + 2 * dmp * dmp)))
    out = pl.pallas_call(
        functools.partial(cross_merge_kernel, d_real=d_real, eps=eps),
        out_shape=jax.ShapeDtypeStruct((n_pad, dmp), ac2.dtype),
        grid_spec=pltpu.PrefetchScalarGridSpec(
            num_scalar_prefetch=0, grid=(n_pad // tm_eff,),
            in_specs=[pl.BlockSpec((tm_eff, dmp), lambda i: (i, 0)),
                      pl.BlockSpec((tm_eff, dmp), lambda i: (i, 0)),
                      pl.BlockSpec((dmp, dmp), lambda i: (0, 0)),
                      pl.BlockSpec((dmp, dmp), lambda i: (0, 0)),
                      pl.BlockSpec((1, dmp), lambda i: (0, 0)),
                      pl.BlockSpec((1, dmp), lambda i: (0, 0)),
                      pl.BlockSpec((tm_eff, dmp), lambda i: (i, 0)),
                      pl.BlockSpec((1, dmp), lambda i: (0, 0)),
                      pl.BlockSpec((1, dmp), lambda i: (0, 0))],
            out_specs=pl.BlockSpec((tm_eff, dmp), lambda i: (i, 0))),
        compiler_params=pltpu.CompilerParams(dimension_semantics=("parallel",)),
        cost_estimate=cost,
    )(acp, aep, wo_c, wo_e, gate_a, gate_b, rp, gamma, beta)
    return out if n_pad == n else out[:n]


def ffn_addnorm(z2, w1, b1, w2, b2, gamma, beta, *, d_real, tk, eps=1e-5, tm=256):
    n, dmp = z2.shape
    dfp = w1.shape[1]
    tk_eff = min(tk, dfp)
    assert dfp % tk_eff == 0
    tm_eff, n_pad = _row_tile(n, tm)
    zp = _pad_rows(z2, n_pad)
    itemsize = zp.dtype.itemsize
    # double-buffered tiles + f32 accumulator; cap scoped VMEM at 32 MiB (v7x-safe).
    vmem_need = (2 * itemsize * (2 * tm_eff * dmp + dmp * tk_eff + tk_eff
                                 + tk_eff * dmp + 3 * dmp) + 4 * tm_eff * dmp)
    vmem_limit = int(min(max(2 * vmem_need, 8 << 20), 32 << 20))
    cost = pl.CostEstimate(
        flops=int(4 * n_pad * dmp * dfp), transcendentals=0,
        bytes_accessed=int(itemsize * (2 * n_pad * dmp + 2 * dmp * dfp + dfp + 3 * dmp)))
    out = pl.pallas_call(
        functools.partial(ffn_addnorm_kernel, d_real=d_real, eps=eps),
        out_shape=jax.ShapeDtypeStruct((n_pad, dmp), z2.dtype),
        grid_spec=pltpu.PrefetchScalarGridSpec(
            num_scalar_prefetch=0,
            grid=(n_pad // tm_eff, dfp // tk_eff),        # reduction (d_ff) axis last
            in_specs=[pl.BlockSpec((tm_eff, dmp), lambda i, k: (i, 0)),   # z row-tile
                      pl.BlockSpec((dmp, tk_eff), lambda i, k: (0, k)),   # W1 col tile
                      pl.BlockSpec((1, tk_eff), lambda i, k: (0, k)),     # b1 tile
                      pl.BlockSpec((tk_eff, dmp), lambda i, k: (k, 0)),   # W2 row tile
                      pl.BlockSpec((1, dmp), lambda i, k: (0, 0)),        # b2 (epilogue)
                      pl.BlockSpec((1, dmp), lambda i, k: (0, 0)),        # gamma3
                      pl.BlockSpec((1, dmp), lambda i, k: (0, 0))],       # beta3
            out_specs=pl.BlockSpec((tm_eff, dmp), lambda i, k: (i, 0)),
            scratch_shapes=[pltpu.VMEM((tm_eff, dmp), jnp.float32)]),
        compiler_params=pltpu.CompilerParams(
            dimension_semantics=("parallel", "arbitrary"),
            vmem_limit_bytes=vmem_limit),
        cost_estimate=cost,
    )(zp, w1, b1, w2, b2, gamma, beta)
    return out if n_pad == n else out[:n]


# --------------------------------------------------------------------------- param prep
def prepare_params(params, *, d_model, d_intent, d_ff, num_heads, tk=512):
    """Pad / fuse all weights ONCE (lane-dense, 128-multiples); cache across decode steps."""
    dmp = _round_up(d_model, 128)
    dip = _round_up(d_intent, 128)
    tk_eff = min(tk, _round_up(d_ff, 128))
    dfp = _round_up(d_ff, tk_eff)

    def pw(w, rows, cols):
        return jnp.pad(w, ((0, rows - w.shape[0]), (0, cols - w.shape[1])))

    def pv(v, cols):
        v = jnp.asarray(v).reshape(1, -1)
        return jnp.pad(v, ((0, 0), (0, cols - v.shape[1])))

    sa, cc, ce = params['self_attn'], params['cross_code'], params['cross_ex']
    wq_s, wk_s, wv_s = pw(sa['wq'], dmp, dmp), pw(sa['wk'], dmp, dmp), pw(sa['wv'], dmp, dmp)

    return dict(
        d_model=d_model, dmp=dmp, dip=dip, dfp=dfp,
        num_heads=num_heads, dh=d_model // num_heads, ffn_tk=tk_eff,
        # self attention
        w_qkv_self=jnp.concatenate([wq_s, wk_s, wv_s], axis=1),
        w_q_self=wq_s,
        w_kv_self=jnp.concatenate([wk_s, wv_s], axis=1),
        wo_self=pw(sa['wo'], dmp, dmp),
        # cross attention: wq split into the y part and the intent part
        w_qy_cross=jnp.concatenate([pw(cc['wq'][:d_model], dmp, dmp),
                                    pw(ce['wq'][:d_model], dmp, dmp)], axis=1),
        w_qi_cross=jnp.concatenate([pw(cc['wq'][d_model:], dip, dmp),
                                    pw(ce['wq'][d_model:], dip, dmp)], axis=1),
        w_kv_code=jnp.concatenate([pw(cc['wk'], dmp, dmp), pw(cc['wv'], dmp, dmp)], axis=1),
        w_kv_ex=jnp.concatenate([pw(ce['wk'], dmp, dmp), pw(ce['wv'], dmp, dmp)], axis=1),
        wo_code=pw(cc['wo'], dmp, dmp),
        wo_ex=pw(ce['wo'], dmp, dmp),
        gate_a=pv(params['gate_w'][:d_model, 0], dmp),
        gate_b=pv(params['gate_w'][d_model:, 0], dmp),
        # FFN
        ffn_w1=pw(params['ffn']['w1'], dmp, dfp),
        ffn_b1=pv(params['ffn']['b1'], dfp),
        ffn_w2=pw(params['ffn']['w2'], dfp, dmp),
        ffn_b2=pv(params['ffn']['b2'], dmp),
        # LayerNorms
        ln1_g=pv(params['ln1'][0], dmp), ln1_b=pv(params['ln1'][1], dmp),
        ln2_g=pv(params['ln2'][0], dmp), ln2_b=pv(params['ln2'][1], dmp),
        ln3_g=pv(params['ln3'][0], dmp), ln3_b=pv(params['ln3'][1], dmp),
    )


# --------------------------------------------------------------------------- forward
def decoder_block_forward(x, state, prep, *, layer_i=0):
    """Eval-mode DecoderBlock.forward.
    state = [code_enc, code_valid_len, [cache...], exemplar_enc, exemplar_valid_len, intent]."""
    P = prep
    B, T, d_model = x.shape
    dmp, H, dh = P['dmp'], P['num_heads'], P['dh']

    code_enc, code_vl = state[0], state[1]
    ex_enc, ex_vl = state[3], state[4]
    intent = state[-1]

    kv_cached = state[2][layer_i]
    key_values = x if kv_cached is None else jnp.concatenate([kv_cached, x], axis=1)
    state[2][layer_i] = key_values
    Tk_self = key_values.shape[1]

    N = B * T
    x2 = _pad_cols(x.reshape(N, d_model), dmp)

    # ---- self attention (fused QKV when the cache is empty) ----
    if kv_cached is None:
        q2, k2, v2 = fused_linear(x2, P['w_qkv_self'], (dmp, dmp, dmp))
    else:
        kv2 = _pad_cols(key_values.reshape(B * Tk_self, d_model), dmp)
        (q2,) = fused_linear(x2, P['w_q_self'], (dmp,))
        k2, v2 = fused_linear(kv2, P['w_kv_self'], (dmp, dmp))

    # dec_valid_lens = None in eval mode; TODO(synk): causal mask for training mode.
    vl_self = jnp.full((B,), Tk_self, dtype=jnp.int32)
    zero_qb = jnp.zeros((B, 1, dmp), x2.dtype)
    a_self = pallas_attention(q2.reshape(B, T, dmp), zero_qb,
                              k2.reshape(B, Tk_self, dmp), v2.reshape(B, Tk_self, dmp),
                              vl_self, num_heads=H, dh=dh)

    # ---- W_o + residual + LN1 (fused) ----
    y2 = wo_addnorm(a_self.reshape(N, dmp), P['wo_self'], x2,
                    P['ln1_g'], P['ln1_b'], d_real=d_model)

    # ---- cross attention (y_intent never materialized) ----
    qc2, qe2 = fused_linear(y2, P['w_qy_cross'], (dmp, dmp))
    intent2 = _pad_cols(intent.reshape(B, intent.shape[-1]), P['dip'])
    ipc2, ipe2 = fused_linear(intent2, P['w_qi_cross'], (dmp, dmp))

    Tc, Te = code_enc.shape[1], ex_enc.shape[1]
    kc2, vc2 = fused_linear(_pad_cols(code_enc.reshape(B * Tc, d_model), dmp),
                            P['w_kv_code'], (dmp, dmp))
    ke2, ve2 = fused_linear(_pad_cols(ex_enc.reshape(B * Te, d_model), dmp),
                            P['w_kv_ex'], (dmp, dmp))

    a_code = pallas_attention(qc2.reshape(B, T, dmp), ipc2.reshape(B, 1, dmp),
                              kc2.reshape(B, Tc, dmp), vc2.reshape(B, Tc, dmp),
                              code_vl.astype(jnp.int32), num_heads=H, dh=dh)
    a_ex = pallas_attention(qe2.reshape(B, T, dmp), ipe2.reshape(B, 1, dmp),
                            ke2.reshape(B, Te, dmp), ve2.reshape(B, Te, dmp),
                            ex_vl.astype(jnp.int32), num_heads=H, dh=dh)

    # ---- dual W_o + gate + residual + LN2 (fused) ----
    z2 = cross_merge(a_code.reshape(N, dmp), a_ex.reshape(N, dmp),
                     P['wo_code'], P['wo_ex'], P['gate_a'], P['gate_b'],
                     y2, P['ln2_g'], P['ln2_b'], d_real=d_model)

    # ---- FFN + residual + LN3 (fused) ----
    out2 = ffn_addnorm(z2, P['ffn_w1'], P['ffn_b1'], P['ffn_w2'], P['ffn_b2'],
                       P['ln3_g'], P['ln3_b'], d_real=d_model, tk=P['ffn_tk'])

    out = out2[:, :d_model].reshape(B, T, d_model)
    return out, state


# --------------------------------------------------------------------------- pure-JAX reference
_HI = jax.lax.Precision.HIGHEST


def _ref_mha(q_in, k_in, v_in, valid_lens, p, h):
    B, Tq, _ = q_in.shape
    Tk = k_in.shape[1]
    q = jnp.dot(q_in, p['wq'], precision=_HI)
    k = jnp.dot(k_in, p['wk'], precision=_HI)
    v = jnp.dot(v_in, p['wv'], precision=_HI)
    Dh = q.shape[-1] // h

    def split(t):
        b_, t_, _ = t.shape
        return t.reshape(b_, t_, h, Dh).transpose(0, 2, 1, 3).reshape(b_ * h, t_, Dh)

    qh, kh, vh = split(q), split(k), split(v)
    s = jnp.einsum('bqd,bkd->bqk', qh, kh, precision=_HI) / math.sqrt(Dh)
    if valid_lens is not None:
        vl = jnp.repeat(valid_lens.astype(jnp.int32), h)
        col = jnp.arange(Tk)[None, None, :]
        s = jnp.where(col < vl[:, None, None], s, -1e6)
    a = jax.nn.softmax(s, axis=-1)
    o = jnp.einsum('bqk,bkd->bqd', a, vh, precision=_HI)
    o = o.reshape(B, h, Tq, Dh).transpose(0, 2, 1, 3).reshape(B, Tq, h * Dh)
    return jnp.dot(o, p['wo'], precision=_HI)


def _ref_add_norm(x, y, gamma, beta, eps=1e-5):
    s = x + y
    mu = jnp.mean(s, axis=-1, keepdims=True)
    c = s - mu
    var = jnp.mean(c * c, axis=-1, keepdims=True)
    return c * jax.lax.rsqrt(var + eps) * gamma + beta


def ref_decoder_block_forward(x, state, params, num_heads, layer_i):
    code_enc, code_vl = state[0], state[1]
    ex_enc, ex_vl = state[3], state[4]
    intent = state[-1]
    kv = x if state[2][layer_i] is None else jnp.concatenate([state[2][layer_i], x], axis=1)

    x2 = _ref_mha(x, kv, kv, None, params['self_attn'], num_heads)
    y = _ref_add_norm(x, x2, *params['ln1'])
    y_intent = jnp.concatenate([y, jnp.tile(intent, (1, y.shape[1], 1))], axis=-1)
    y2t = _ref_mha(y_intent, code_enc, code_enc, code_vl, params['cross_code'], num_heads)
    y2e = _ref_mha(y_intent, ex_enc, ex_enc, ex_vl, params['cross_ex'], num_heads)
    g = jax.nn.sigmoid(jnp.dot(jnp.concatenate([y2t, y2e], axis=-1),
                               params['gate_w'], precision=_HI))
    y2 = g * y2t + (1.0 - g) * y2e
    z = _ref_add_norm(y, y2, *params['ln2'])
    f = params['ffn']
    ffn = jnp.dot(jnp.maximum(jnp.dot(z, f['w1'], precision=_HI) + f['b1'], 0.0),
                  f['w2'], precision=_HI) + f['b2']
    return _ref_add_norm(z, ffn, *params['ln3'])


# --------------------------------------------------------------------------- params / main
def init_params(key, d_model, d_intent, d_ff):
    ks = iter(jax.random.split(key, 32))

    def u(shape, fan_in):
        lim = 1.0 / math.sqrt(fan_in)
        return jax.random.uniform(next(ks), shape, jnp.float32, -lim, lim)

    def attn(dq):
        return dict(wq=u((dq, d_model), dq), wk=u((d_model, d_model), d_model),
                    wv=u((d_model, d_model), d_model), wo=u((d_model, d_model), d_model))

    def ln():
        return (jnp.ones((d_model,), jnp.float32) + 0.05 * jax.random.normal(next(ks), (d_model,)),
                0.05 * jax.random.normal(next(ks), (d_model,)))

    p = {}
    p['self_attn'] = attn(d_model)
    p['cross_code'] = attn(d_model + d_intent)
    p['cross_ex'] = attn(d_model + d_intent)
    p['gate_w'] = u((2 * d_model, 1), 2 * d_model)
    p['ffn'] = dict(w1=u((d_model, d_ff), d_model), b1=u((d_ff,), d_model),
                    w2=u((d_ff, d_model), d_ff), b2=u((d_model,), d_ff))
    p['ln1'], p['ln2'], p['ln3'] = ln(), ln(), ln()
    return p


if __name__ == "__main__":
    batch, dec_seq = 2, 8
    d_model, d_intent, d_ff, head_num = 32, 16, 64, 4
    code_seq, ex_seq = 10, 12

    key = jax.random.PRNGKey(0)
    kp, kx, kc, ke, ki = jax.random.split(key, 5)

    params = init_params(kp, d_model, d_intent, d_ff)
    prep = prepare_params(params, d_model=d_model, d_intent=d_intent, d_ff=d_ff,
                          num_heads=head_num)

    x = jax.random.normal(kx, (batch, dec_seq, d_model), jnp.float32)
    code_enc = jax.random.normal(kc, (batch, code_seq, d_model), jnp.float32)
    exemplar_enc = jax.random.normal(ke, (batch, ex_seq, d_model), jnp.float32)
    intent_embed = jax.random.normal(ki, (batch, 1, d_intent), jnp.float32)
    code_vl = jnp.array([code_seq, 7], jnp.int32)
    ex_vl = jnp.array([ex_seq, 5], jnp.int32)

    state = [code_enc, code_vl, [None], exemplar_enc, ex_vl, intent_embed]
    out, state = decoder_block_forward(x, state, prep, layer_i=0)
    out = jax.block_until_ready(out)

    ref_state = [code_enc, code_vl, [None], exemplar_enc, ex_vl, intent_embed]
    ref = ref_decoder_block_forward(x, ref_state, params, head_num, 0)

    assert out.shape == (batch, dec_seq, d_model)
    assert state[2][0].shape == (batch, dec_seq, d_model)
    err = float(jnp.max(jnp.abs(out - ref)))
    # tolerance allows for the EUP approximate-reciprocal softmax normalization
    assert err < 5e-3, f"max abs error too large: {err}"
    print("KERNEL_OK")
</pallas_src>

<mosaic_0001>
module attributes {stable_mosaic.version = 11 : i64} {
  func.func @fused_linear_kernel(%arg0: i32, %arg1: memref<8x128xf32, #tpu.memory_space<vmem>>, %arg2: memref<128x384xf32, #tpu.memory_space<vmem>>, %arg3: memref<8x128xf32, #tpu.memory_space<vmem>>, %arg4: memref<8x128xf32, #tpu.memory_space<vmem>>, %arg5: memref<8x128xf32, #tpu.memory_space<vmem>>) attributes {dimension_semantics = [#tpu.dimension_semantics<parallel>], iteration_bounds = array<i64: 2>, scalar_prefetch = 0 : i64, scratch_operands = 0 : i64, tpu.core_type = #tpu.core_type<tc>, window_params = [{transform_indices = @transform_0, window_bounds = array<i64: 8, 128>}, {pipeline_mode = #tpu.pipeline_mode<synchronous>, transform_indices = @transform_1, window_bounds = array<i64: 128, 384>}, {transform_indices = @transform_2, window_bounds = array<i64: 8, 128>}, {transform_indices = @transform_3, window_bounds = array<i64: 8, 128>}, {transform_indices = @transform_4, window_bounds = array<i64: 8, 128>}]} {
    %c0 = arith.constant 0 : index
    %c0_0 = arith.constant 0 : index
    %0 = vector.load %arg1[%c0, %c0_0] : memref<8x128xf32, #tpu.memory_space<vmem>>, vector<8x128xf32>
    %c0_1 = arith.constant 0 : index
    %c0_2 = arith.constant 0 : index
    %1 = vector.load %arg2[%c0_1, %c0_2] : memref<128x384xf32, #tpu.memory_space<vmem>>, vector<128x384xf32>
    %cst = arith.constant dense<0.000000e+00> : vector<8x384xf32>
    %2 = tpu.matmul %0, %1, %cst {dimension_numbers = #tpu.dot_dimension_numbers<[1], [0], [0], [1], [0, 0, 1, 1], [], []>} : vector<8x128xf32>, vector<128x384xf32>, vector<8x384xf32> -> vector<8x384xf32>
    %3 = vector.extract_strided_slice %2 {offsets = [0, 0], sizes = [8, 128], strides = [1, 1]} : vector<8x384xf32> to vector<8x128xf32>
    %c0_3 = arith.constant 0 : index
    %c0_4 = arith.constant 0 : index
    %4 = vector.load %arg3[%c0_3, %c0_4] : memref<8x128xf32, #tpu.memory_space<vmem>>, vector<8x128xf32>
    tpu.vector_store %arg3[%c0_3, %c0_4], %3 {strides = array<i32>} : memref<8x128xf32, #tpu.memory_space<vmem>>, vector<8x128xf32>,
    %5 = vector.extract_strided_slice %2 {offsets = [0, 128], sizes = [8, 128], strides = [1, 1]} : vector<8x384xf32> to vector<8x128xf32>
    %c0_5 = arith.constant 0 : index
    %c0_6 = arith.constant 0 : index
    %6 = vector.load %arg4[%c0_5, %c0_6] : memref<8x128xf32, #tpu.memory_space<vmem>>, vector<8x128xf32>
    tpu.vector_store %arg4[%c0_5, %c0_6], %5 {strides = array<i32>} : memref<8x128xf32, #tpu.memory_space<vmem>>, vector<8x128xf32>,
    %7 = vector.extract_strided_slice %2 {offsets = [0, 256], sizes = [8, 128], strides = [1, 1]} : vector<8x384xf32> to vector<8x128xf32>
    %c0_7 = arith.constant 0 : index
    %c0_8 = arith.constant 0 : index
    %8 = vector.load %arg5[%c0_7, %c0_8] : memref<8x128xf32, #tpu.memory_space<vmem>>, vector<8x128xf32>
    tpu.vector_store %arg5[%c0_7, %c0_8], %7 {strides = array<i32>} : memref<8x128xf32, #tpu.memory_space<vmem>>, vector<8x128xf32>,
    return
  }
  func.func @transform_0(%arg0: i32) -> (i32, i32) {
    %c0_i32 = arith.constant 0 : i32
    %c0_i32_0 = arith.constant 0 : i32
    return %arg0, %c0_i32 : i32, i32
  }
  func.func @transform_1(%arg0: i32) -> (i32, i32) {
    %c0_i32 = arith.constant 0 : i32
    %c0_i32_0 = arith.constant 0 : i32
    %c0_i32_1 = arith.constant 0 : i32
    return %c0_i32, %c0_i32_0 : i32, i32
  }
  func.func @transform_2(%arg0: i32) -> (i32, i32) {
    %c0_i32 = arith.constant 0 : i32
    %c0_i32_0 = arith.constant 0 : i32
    return %arg0, %c0_i32 : i32, i32
  }
  func.func @transform_3(%arg0: i32) -> (i32, i32) {
    %c0_i32 = arith.constant 0 : i32
    %c0_i32_0 = arith.constant 0 : i32
    return %arg0, %c0_i32 : i32, i32
  }
  func.func @transform_4(%arg0: i32) -> (i32, i32) {
    %c0_i32 = arith.constant 0 : i32
    %c0_i32_0 = arith.constant 0 : i32
    return %arg0, %c0_i32 : i32, i32
  }
}

</mosaic_0001>

<llo_original>
// kernel: tpu_custom_call.1
$region0: #{tpu_custom_call.1}
  #allocation0 [shape = 'u32[]', space=smem, size = 0x4, offset = 0x4, fixed_abs, tag = 'smem constant byte address 0x4 - core index']
  #allocation1 [shape = 'u32[144,128]{1,0:T(1,128)}', space=vmem, size = 0x12000, scoped, tag = 'internal scratch']
  %s0 = inlined_call_operand.hbm [shape: f32[16,128], index: 0, kind: input, shape index: {}]
  %s1 = inlined_call_operand.hbm [shape: f32[128,384], index: 1, kind: input, shape index: {}]
  %s2 = inlined_call_operand.hbm [shape: f32[16,128], index: 2, kind: output, shape index: {0}]
  %s3 = inlined_call_operand.hbm [shape: f32[16,128], index: 3, kind: output, shape index: {1}]
  %s4 = inlined_call_operand.hbm [shape: f32[16,128], index: 4, kind: output, shape index: {2}]
  %5 = xla_tuple %s2, %s3, %s4
  %s6 = sld [smem:[#allocation0]]
  $region65: #{tpu_custom_call.1} parent=0
    _
  %s8 = ssub.s32 1, %s6
  %s9 = scalar_select 0, %s8, %s6
  $region1: #{tpu_custom_call.1} parent=0
    #allocation2 [shape = 'u8[8192]{0}', space=vmem, size = 0x2000, scoped, tag = 'input window, operand 0']
    #allocation3 [shape = 's32[2]{0}', space=sflag, size = 0x8, scoped, tag = 'scoped memory for tpu_custom_call.1']
    #allocation4 [shape = 's32[2]{0}', space=sflag, size = 0x8, scoped, tag = 'scoped memory for tpu_custom_call.1']
    #allocation5 [shape = 'u8[196608]{0}', space=vmem, size = 0x30000, scoped, tag = 'input window, operand 1, single buffered']
    #allocation6 [shape = 's32[1]{0}', space=sflag, size = 0x4, scoped, tag = 'scoped memory for tpu_custom_call.1']
    #allocation7 [shape = 'u8[8192]{0}', space=vmem, size = 0x2000, scoped, tag = 'output window, operand 0']
    #allocation8 [shape = 'u8[8192]{0}', space=vmem, size = 0x2000, scoped, tag = 'output window, operand 1']
    #allocation9 [shape = 's32[2]{0}', space=sflag, size = 0x8, scoped, tag = 'scoped memory for tpu_custom_call.1']
    #allocation10 [shape = 'u8[8192]{0}', space=vmem, size = 0x2000, scoped, tag = 'output window, operand 2']
    %10 = vsyncpa [#allocation3], 0
    %s11 = scalar_lea.sflag [#allocation3], 1
    %12 = vsyncpa %s11, 0
    %13 = vsyncpa [#allocation6], 0
    %14 = vsyncpa [#allocation4], 0
    %s15 = scalar_lea.sflag [#allocation4], 1
    %16 = vsyncpa %s15, 0
    %17 = vsyncpa [#allocation9], 0
    %s18 = scalar_lea.sflag [#allocation9], 1
    %19 = vsyncpa %s18, 0
    loop: start=0, step=1, limit=4
    $region2: #{tpu_custom_call.1} parent=1 // loop_pre_header
      _
    $region3: #{tpu_custom_call.1} parent=1 // loop_header
      %s21 = sphi 0, %s25
      %p22 = scmp.ge.s32.totalorder %s21, 4
      %s31 = sphi 0, %s33
      %s34 = sphi 0, %s31
      %s35 = sphi 0, %s34
      %s51 = sphi 0, %s35
      %s55 = sphi 0, %s55
      %s57 = sphi 0, %s55
      %s58 = sphi 0, %s57
      %s72 = sphi 0, %s58
      %s78 = sphi 0, %s80
      %s81 = sphi 0, %s78
      %s82 = sphi 0, %s81
      %s98 = sphi 0, %s82
      %s104 = sphi 0, %s106
      %s107 = sphi 0, %s104
      %s108 = sphi 0, %s107
      %s124 = sphi 0, %s108
      %s130 = sphi 0, %s132
      %s133 = sphi 0, %s130
      %s134 = sphi 0, %s133
      %s150 = sphi 0, %s134
    $region4: #{tpu_custom_call.1} parent=1 // loop_header_branch
      %24 = sbr.rel (%p22) target = $region8
    $region5: #{tpu_custom_call.1} parent=1 // loop_body
      %s26 = ssub.s32 %s21, 1
      %s27 = ssub.s32 %s21, 2
      %s28 = sadd.s32 %s21, 1
      %s29 = ssub.s32 %s21, %s28
      %p30 = scmp.eq.s32.totalorder %s29, 0
      %s32 = sadd.s32 %s31, 1
      %s33 = scalar_select %p30, %s31, %s32
      %p36 = pneg %p30
      %p37 = scmp.eq.s32.totalorder %s21, 1
      %p38 = por %p36, %p37
      %p39 = scmp.ne.s32.totalorder %s31, %s34
      %p40 = scmp.eq.s32.totalorder %s21, 0
      %p41 = por %p39, %p40
      %p42 = scmp.ne.s32.totalorder %s31, %s34
      %p43 = scmp.eq.s32.totalorder %s26, 1
      %p44 = por %p42, %p43
      %p45 = scmp.ne.s32.totalorder %s34, %s35
      %p46 = scmp.eq.s32.totalorder %s26, 0
      %p47 = por %p45, %p46
      %p48 = scmp.ne.s32.totalorder %s34, %s35
      %p49 = scmp.eq.s32.totalorder %s27, 1
      %p50 = por %p48, %p49
      %p52 = scmp.ne.s32.totalorder %s35, %s51
      %p53 = scmp.eq.s32.totalorder %s27, 0
      %p54 = por %p52, %p53
      %s56 = sadd.s32 %s55, 1
      %p59 = scmp.eq.s32.totalorder %s21, 1
      %p60 = scmp.ne.s32.totalorder %s55, %s57
      %p61 = scmp.eq.s32.totalorder %s21, 0
      %p62 = por %p60, %p61
      %p63 = scmp.ne.s32.totalorder %s55, %s57
      %p64 = scmp.eq.s32.totalorder %s26, 1
      %p65 = por %p63, %p64
      %p66 = scmp.ne.s32.totalorder %s57, %s58
      %p67 = scmp.eq.s32.totalorder %s26, 0
      %p68 = por %p66, %p67
      %p69 = scmp.ne.s32.totalorder %s57, %s58
      %p70 = scmp.eq.s32.totalorder %s27, 1
      %p71 = por %p69, %p70
      %p73 = scmp.ne.s32.totalorder %s58, %s72
      %p74 = scmp.eq.s32.totalorder %s27, 0
      %p75 = por %p73, %p74
      %s76 = ssub.s32 %s21, %s28
      %p77 = scmp.eq.s32.totalorder %s76, 0
      %s79 = sadd.s32 %s78, 1
      %s80 = scalar_select %p77, %s78, %s79
      %p83 = pneg %p77
      %p84 = scmp.eq.s32.totalorder %s21, 1
      %p85 = por %p83, %p84
      %p86 = scmp.ne.s32.totalorder %s78, %s81
      %p87 = scmp.eq.s32.totalorder %s21, 0
      %p88 = por %p86, %p87
      %p89 = scmp.ne.s32.totalorder %s78, %s81
      %p90 = scmp.eq.s32.totalorder %s26, 1
      %p91 = por %p89, %p90
      %p92 = scmp.ne.s32.totalorder %s81, %s82
      %p93 = scmp.eq.s32.totalorder %s26, 0
      %p94 = por %p92, %p93
      %p95 = scmp.ne.s32.totalorder %s81, %s82
      %p96 = scmp.eq.s32.totalorder %s27, 1
      %p97 = por %p95, %p96
      %p99 = scmp.ne.s32.totalorder %s82, %s98
      %p100 = scmp.eq.s32.totalorder %s27, 0
      %p101 = por %p99, %p100
      %s102 = ssub.s32 %s21, %s28
      %p103 = scmp.eq.s32.totalorder %s102, 0
      %s105 = sadd.s32 %s104, 1
      %s106 = scalar_select %p103, %s104, %s105
      %p109 = pneg %p103
      %p110 = scmp.eq.s32.totalorder %s21, 1
      %p111 = por %p109, %p110
      %p112 = scmp.ne.s32.totalorder %s104, %s107
      %p113 = scmp.eq.s32.totalorder %s21, 0
      %p114 = por %p112, %p113
      %p115 = scmp.ne.s32.totalorder %s104, %s107
      %p116 = scmp.eq.s32.totalorder %s26, 1
      %p117 = por %p115, %p116
      %p118 = scmp.ne.s32.totalorder %s107, %s108
      %p119 = scmp.eq.s32.totalorder %s26, 0
      %p120 = por %p118, %p119
      %p121 = scmp.ne.s32.totalorder %s107, %s108
      %p122 = scmp.eq.s32.totalorder %s27, 1
      %p123 = por %p121, %p122
      %p125 = scmp.ne.s32.totalorder %s108, %s124
      %p126 = scmp.eq.s32.totalorder %s27, 0
      %p127 = por %p125, %p126
      %s128 = ssub.s32 %s21, %s28
      %p129 = scmp.eq.s32.totalorder %s128, 0
      %s131 = sadd.s32 %s130, 1
      %s132 = scalar_select %p129, %s130, %s131
      %p135 = pneg %p129
      %p136 = scmp.eq.s32.totalorder %s21, 1
      %p137 = por %p135, %p136
      %p138 = scmp.ne.s32.totalorder %s130, %s133
      %p139 = scmp.eq.s32.totalorder %s21, 0
      %p140 = por %p138, %p139
      %p141 = scmp.ne.s32.totalorder %s130, %s133
      %p142 = scmp.eq.s32.totalorder %s26, 1
      %p143 = por %p141, %p142
      %p144 = scmp.ne.s32.totalorder %s133, %s134
      %p145 = scmp.eq.s32.totalorder %s26, 0
      %p146 = por %p144, %p145
      %p147 = scmp.ne.s32.totalorder %s133, %s134
      %p148 = scmp.eq.s32.totalorder %s27, 1
      %p149 = por %p147, %p148
      %p151 = scmp.ne.s32.totalorder %s134, %s150
      %p152 = scmp.eq.s32.totalorder %s27, 0
      %p153 = por %p151, %p152
      %p154 = scmp.le.s32.totalorder 1, %s21
      %p155 = scmp.lt.s32.totalorder %s21, 3
      %p156 = pnand %p154, %p155
      %p157 = pneg %p156
      // Predicated region
      $region9: #{tpu_custom_call.1} parent=5 // pred_check
        _
      $region10: #{tpu_custom_call.1} parent=5 // pred_check_branch
        %159 = sbr.rel (%p156) target = $region12
      $region11: #{tpu_custom_call.1} parent=5 // pred_region
        %s160 = ssub.s32 %s21, 1
        // Predicated region
        $region13: #{tpu_custom_call.1} parent=11 // pred_check
          %p161 = pneg %p68
        $region14: #{tpu_custom_call.1} parent=11 // pred_check_branch
          %163 = sbr.rel (%p161) target = $region16
        $region15: #{tpu_custom_call.1} parent=11 // pred_region
          %s165 = ssub.s32 6144, 6144
          %166 = vsyncadd [#allocation6], %s165
          %s167 = sshll.u32 [#allocation5], 4
          %s168 = int_to_ptr.vmem [resolvable:$true] %s167
          %173 = dma.hbm_to_vmem [thread:$0]  %s1, 6144, %s168, [#allocation6], 384, 384, 24
        $region16: #{tpu_custom_call.1} parent=11 // pred_fallthru
          _
      $region12: #{tpu_custom_call.1} parent=5 // pred_fallthru
        _
      %p174 = scmp.lt.s32.totalorder %s21, 2
      // Predicated region
      $region17: #{tpu_custom_call.1} parent=5 // pred_check
        %p175 = pneg %p174
      $region18: #{tpu_custom_call.1} parent=5 // pred_check_branch
        %177 = sbr.rel (%p175) target = $region20
      $region19: #{tpu_custom_call.1} parent=5 // pred_region
        // Predicated region
        $region21: #{tpu_custom_call.1} parent=19 // pred_check
          %p178 = pneg %p41
        $region22: #{tpu_custom_call.1} parent=19 // pred_check_branch
          %180 = sbr.rel (%p178) target = $region24
        $region23: #{tpu_custom_call.1} parent=19 // pred_region
          %s181 = sand.u32 %s31, 1
          %s182 = scalar_lea.sflag [#allocation3], %s181
          %s183 = sand.u32 %s31, 1
          %s184 = smul.addr %s183, 8
          %s185 = scalar_lea.vmem [#allocation2], %s184
          %s187 = ssub.s32 128, 128
          %188 = vsyncadd %s182, %s187
          %s189 = smul.addr %s21, 128
          %s190 = scalar_lea.hbm %s0, %s189
          %s192 = sshll.u32 %s185, 4
          %s193 = int_to_ptr.vmem [resolvable:$true] %s192
          %195 = dma.hbm_to_vmem [thread:$0]  %s190, 128, %s193, %s182
        $region24: #{tpu_custom_call.1} parent=19 // pred_fallthru
          _
      $region20: #{tpu_custom_call.1} parent=5 // pred_fallthru
        _
      %p196 = scmp.le.s32.totalorder 1, %s21
      %p197 = scmp.lt.s32.totalorder %s21, 3
      %p198 = pnand %p196, %p197
      %p199 = pneg %p198
      // Predicated region
      $region25: #{tpu_custom_call.1} parent=5 // pred_check
        _
      $region26: #{tpu_custom_call.1} parent=5 // pred_check_branch
        %201 = sbr.rel (%p198) target = $region28
      $region27: #{tpu_custom_call.1} parent=5 // pred_region
        %s202 = ssub.s32 %s21, 1
        %s203 = sand.u32 %s34, 1
        %s204 = scalar_lea.sflag [#allocation3], %s203
        %s205 = sand.u32 %s34, 1
        %s206 = smul.addr %s205, 8
        %s207 = scalar_lea.vmem [#allocation2], %s206
        // Predicated region
        $region29: #{tpu_custom_call.1} parent=27 // pred_check
          %p208 = pneg %p47
        $region30: #{tpu_custom_call.1} parent=27 // pred_check_branch
          %210 = sbr.rel (%p208) target = $region32
        $region31: #{tpu_custom_call.1} parent=27 // pred_region
          %211 = dma.done %s204, 128
        $region32: #{tpu_custom_call.1} parent=27 // pred_fallthru
          _
        // Predicated region
        $region33: #{tpu_custom_call.1} parent=27 // pred_check
          %p212 = pneg %p68
        $region34: #{tpu_custom_call.1} parent=27 // pred_check_branch
          %214 = sbr.rel (%p212) target = $region36
        $region35: #{tpu_custom_call.1} parent=27 // pred_region
          %215 = dma.done [#allocation6], 6144
        $region36: #{tpu_custom_call.1} parent=27 // pred_fallthru
          _
        %s216 = sand.u32 %s34, 1
        %s217 = scalar_lea.sflag [#allocation3], %s216
        %s218 = sand.u32 %s34, 1
        %s219 = smul.addr %s218, 8
        %s220 = scalar_lea.vmem [#allocation2], %s219
        %p221 = pneg %p47
        %p222 = pneg %p44
        %p223 = pneg %p68
        %p224 = pneg %p65
        %p225 = pneg %p94
        %p226 = pneg %p91
        %s227 = sand.u32 %s81, 1
        %s228 = scalar_lea.sflag [#allocation4], %s227
        %s229 = sand.u32 %s81, 1
        %s230 = smul.addr %s229, 8
        %s231 = scalar_lea.vmem [#allocation7], %s230
        %p232 = pneg %p120
        %p233 = pneg %p117
        %s234 = sand.u32 %s26, 1
        %s235 = scalar_lea.sflag [#allocation9], %s234
        %s236 = sand.u32 %s107, 1
        %s237 = smul.addr %s236, 8
        %s238 = scalar_lea.vmem [#allocation8], %s237
        %p239 = pneg %p146
        %p240 = pneg %p143
        %s241 = sand.u32 %s26, 1
        %s242 = scalar_lea.sflag [#allocation9], %s241
        %s243 = sand.u32 %s133, 1
        %s244 = smul.addr %s243, 8
        %s245 = scalar_lea.vmem [#allocation10], %s244
        %v246 = vld [vmem:[%s207] sm:$0xff]
        %v247 = vld [vmem:[#allocation5] sm:$0xff]
        %v248 = vld [vmem:[#allocation5 + $0x8] sm:$0xff]
        %v249 = vld [vmem:[#allocation5 + $0x10] sm:$0xff]
        %v250 = vld [vmem:[#allocation5 + $0x18] sm:$0xff]
        %v251 = vld [vmem:[#allocation5 + $0x20] sm:$0xff]
        %v252 = vld [vmem:[#allocation5 + $0x28] sm:$0xff]
        %v253 = vld [vmem:[#allocation5 + $0x30] sm:$0xff]
        %v254 = vld [vmem:[#allocation5 + $0x38] sm:$0xff]
        %v255 = vld [vmem:[#allocation5 + $0x40] sm:$0xff]
        %v256 = vld [vmem:[#allocation5 + $0x48] sm:$0xff]
        %v257 = vld [vmem:[#allocation5 + $0x50] sm:$0xff]
        %v258 = vld [vmem:[#allocation5 + $0x58] sm:$0xff]
        %v259 = vld [vmem:[#allocation5 + $0x60] sm:$0xff]
        %v260 = vld [vmem:[#allocation5 + $0x68] sm:$0xff]
        %v261 = vld [vmem:[#allocation5 + $0x70] sm:$0xff]
        %v262 = vld [vmem:[#allocation5 + $0x78] sm:$0xff]
        %v263 = vld [vmem:[#allocation5 + $0x80] sm:$0xff]
        %v264 = vld [vmem:[#allocation5 + $0x88] sm:$0xff]
        %v265 = vld [vmem:[#allocation5 + $0x90] sm:$0xff]
        %v266 = vld [vmem:[#allocation5 + $0x98] sm:$0xff]
        %v267 = vld [vmem:[#allocation5 + $0xa0] sm:$0xff]
        %v268 = vld [vmem:[#allocation5 + $0xa8] sm:$0xff]
        %v269 = vld [vmem:[#allocation5 + $0xb0] sm:$0xff]
        %v270 = vld [vmem:[#allocation5 + $0xb8] sm:$0xff]
        %v271 = vld [vmem:[#allocation5 + $0xc0] sm:$0xff]
        %v272 = vld [vmem:[#allocation5 + $0xc8] sm:$0xff]
        %v273 = vld [vmem:[#allocation5 + $0xd0] sm:$0xff]
        %v274 = vld [vmem:[#allocation5 + $0xd8] sm:$0xff]
        %v275 = vld [vmem:[#allocation5 + $0xe0] sm:$0xff]
        %v276 = vld [vmem:[#allocation5 + $0xe8] sm:$0xff]
        %v277 = vld [vmem:[#allocation5 + $0xf0] sm:$0xff]
        %v278 = vld [vmem:[#allocation5 + $0xf8] sm:$0xff]
        %v279 = vld [vmem:[#allocation5 + $0x100] sm:$0xff]
        %v280 = vld [vmem:[#allocation5 + $0x108] sm:$0xff]
        %v281 = vld [vmem:[#allocation5 + $0x110] sm:$0xff]
        %v282 = vld [vmem:[#allocation5 + $0x118] sm:$0xff]
        %v283 = vld [vmem:[#allocation5 + $0x120] sm:$0xff]
        %v284 = vld [vmem:[#allocation5 + $0x128] sm:$0xff]
        %v285 = vld [vmem:[#allocation5 + $0x130] sm:$0xff]
        %v286 = vld [vmem:[#allocation5 + $0x138] sm:$0xff]
        %v287 = vld [vmem:[#allocation5 + $0x140] sm:$0xff]
        %v288 = vld [vmem:[#allocation5 + $0x148] sm:$0xff]
        %v289 = vld [vmem:[#allocation5 + $0x150] sm:$0xff]
        %v290 = vld [vmem:[#allocation5 + $0x158] sm:$0xff]
        %v291 = vld [vmem:[#allocation5 + $0x160] sm:$0xff]
        %v292 = vld [vmem:[#allocation5 + $0x168] sm:$0xff]
        %v293 = vld [vmem:[#allocation5 + $0x170] sm:$0xff]
        %v294 = vld [vmem:[#allocation5 + $0x178] sm:$0xff]
        %295 = vmatprep.subr.mxu0 %v293
        %296 = vmatpush1.msra.mxu0 %v292
        %297 = vmatprep.subr.mxu0 %v290
        %298 = vmatpush1.msra.mxu0 %v289
        %299 = vmatprep.subr.mxu0 %v287
        %300 = vmatpush1.msra.mxu0 %v286
        %301 = vmatprep.subr.mxu0 %v284
        %302 = vmatpush1.msra.mxu0 %v283
        %303 = vmatprep.subr.mxu0 %v281
        %304 = vmatpush1.msra.mxu0 %v280
        %305 = vmatprep.subr.mxu0 %v278
        %306 = vmatpush1.msra.mxu0 %v277
        %307 = vmatprep.subr.mxu0 %v275
        %308 = vmatpush1.msra.mxu0 %v274
        %309 = vmatprep.subr.mxu0 %v272
        %310 = vmatpush1.msra.mxu0 %v271
        %311 = vmatprep.subr.mxu0 %v269
        %312 = vmatpush1.msra.mxu0 %v268
        %313 = vmatprep.subr.mxu0 %v266
        %314 = vmatpush1.msra.mxu0 %v265
        %315 = vmatprep.subr.mxu0 %v263
        %316 = vmatpush1.msra.mxu0 %v262
        %317 = vmatprep.subr.mxu0 %v260
        %318 = vmatpush1.msra.mxu0 %v259
        %319 = vmatprep.subr.mxu0 %v257
        %320 = vmatpush1.msra.mxu0 %v256
        %321 = vmatprep.subr.mxu0 %v254
        %322 = vmatpush1.msra.mxu0 %v253
        %323 = vmatprep.subr.mxu0 %v251
        %324 = vmatpush1.msra.mxu0 %v250
        %325 = vmatprep.subr.mxu0 %v248
        %326 = vmatpush1.msra.mxu0 %v247
        %327 = vmatprep.subr.mxu0 0.0
        %328 = vmatpush2.msra.mxu0 0.0
        %329 = vmatprep.subr.mxu0 0.0
        %330 = vmatpush2.msra.mxu0 0.0
        %331 = vmatprep.subr.mxu0 0.0
        %332 = vmatpush2.msra.mxu0 0.0
        %333 = vmatprep.subr.mxu0 0.0
        %334 = vmatpush2.msra.mxu0 0.0
        %335 = vmatprep.subr.mxu0 0.0
        %336 = vmatpush2.msra.mxu0 0.0
        %337 = vmatprep.subr.mxu0 0.0
        %338 = vmatpush2.msra.mxu0 0.0
        %339 = vmatprep.subr.mxu0 0.0
        %340 = vmatpush2.msra.mxu0 0.0
        %341 = vmatprep.subr.mxu0 0.0
        %342 = vmatpush2.msra.mxu0 0.0
        %343 = vmatprep.subr.mxu0 0.0
        %344 = vmatpush2.msra.mxu0 0.0
        %345 = vmatprep.subr.mxu0 0.0
        %346 = vmatpush2.msra.mxu0 0.0
        %347 = vmatprep.subr.mxu0 0.0
        %348 = vmatpush2.msra.mxu0 0.0
        %349 = vmatprep.subr.mxu0 0.0
        %350 = vmatpush2.msra.mxu0 0.0
        %351 = vmatprep.subr.mxu0 0.0
        %352 = vmatpush2.msra.mxu0 0.0
        %353 = vmatprep.subr.mxu0 0.0
        %354 = vmatpush2.msra.mxu0 0.0
        %355 = vmatprep.subr.mxu0 0.0
        %356 = vmatpush2.msra.mxu0 0.0
        %357 = vmatprep.subr.mxu0 0.0
        %358 = vmatpush2.msra.mxu0 0.0
        %359 = vmatprep.mubr.f32.mxu0 0.0
        %360 = vmatmul.mubr.f32.gmra.mxu0 %v246
        %v361 = vpop.f32.mrf.mxu0
        %v362 = vadd.f32 0.0, %v361
        %v363 = vpop.f32.mrf.mxu0
        %v364 = vadd.f32 0.0, %v363
        %365 = vdwg.mxu0
        %366 = vmatprep.subr.mxu0 0.0
        %367 = vmatpush1.msra.mxu0 %v294
        %368 = vmatprep.subr.mxu0 0.0
        %369 = vmatpush1.msra.mxu0 %v291
        %370 = vmatprep.subr.mxu0 0.0
        %371 = vmatpush1.msra.mxu0 %v288
        %372 = vmatprep.subr.mxu0 0.0
        %373 = vmatpush1.msra.mxu0 %v285
        %374 = vmatprep.subr.mxu0 0.0
        %375 = vmatpush1.msra.mxu0 %v282
        %376 = vmatprep.subr.mxu0 0.0
        %377 = vmatpush1.msra.mxu0 %v279
        %378 = vmatprep.subr.mxu0 0.0
        %379 = vmatpush1.msra.mxu0 %v276
        %380 = vmatprep.subr.mxu0 0.0
        %381 = vmatpush1.msra.mxu0 %v273
        %382 = vmatprep.subr.mxu0 0.0
        %383 = vmatpush1.msra.mxu0 %v270
        %384 = vmatprep.subr.mxu0 0.0
        %385 = vmatpush1.msra.mxu0 %v267
        %386 = vmatprep.subr.mxu0 0.0
        %387 = vmatpush1.msra.mxu0 %v264
        %388 = vmatprep.subr.mxu0 0.0
        %389 = vmatpush1.msra.mxu0 %v261
        %390 = vmatprep.subr.mxu0 0.0
        %391 = vmatpush1.msra.mxu0 %v258
        %392 = vmatprep.subr.mxu0 0.0
        %393 = vmatpush1.msra.mxu0 %v255
        %394 = vmatprep.subr.mxu0 0.0
        %395 = vmatpush1.msra.mxu0 %v252
        %396 = vmatprep.subr.mxu0 0.0
        %397 = vmatpush1.msra.mxu0 %v249
        %398 = vmatprep.subr.mxu0 0.0
        %399 = vmatpush2.msra.mxu0 0.0
        %400 = vmatprep.subr.mxu0 0.0
        %401 = vmatpush2.msra.mxu0 0.0
        %402 = vmatprep.subr.mxu0 0.0
        %403 = vmatpush2.msra.mxu0 0.0
        %404 = vmatprep.subr.mxu0 0.0
        %405 = vmatpush2.msra.mxu0 0.0
        %406 = vmatprep.subr.mxu0 0.0
        %407 = vmatpush2.msra.mxu0 0.0
        %408 = vmatprep.subr.mxu0 0.0
        %409 = vmatpush2.msra.mxu0 0.0
        %410 = vmatprep.subr.mxu0 0.0
        %411 = vmatpush2.msra.mxu0 0.0
        %412 = vmatprep.subr.mxu0 0.0
        %413 = vmatpush2.msra.mxu0 0.0
        %414 = vmatprep.subr.mxu0 0.0
        %415 = vmatpush2.msra.mxu0 0.0
        %416 = vmatprep.subr.mxu0 0.0
        %417 = vmatpush2.msra.mxu0 0.0
        %418 = vmatprep.subr.mxu0 0.0
        %419 = vmatpush2.msra.mxu0 0.0
        %420 = vmatprep.subr.mxu0 0.0
        %421 = vmatpush2.msra.mxu0 0.0
        %422 = vmatprep.subr.mxu0 0.0
        %423 = vmatpush2.msra.mxu0 0.0
        %424 = vmatprep.subr.mxu0 0.0
        %425 = vmatpush2.msra.mxu0 0.0
        %426 = vmatprep.subr.mxu0 0.0
        %427 = vmatpush2.msra.mxu0 0.0
        %428 = vmatprep.subr.mxu0 0.0
        %429 = vmatpush2.msra.mxu0 0.0
        %430 = vmatprep.mubr.f32.mxu0 0.0
        %431 = vmatmul.mubr.f32.gmra.mxu0 %v246
        %v432 = vpop.f32.mrf.mxu0
        %v433 = vadd.f32 0.0, %v432
        %v434 = vpop.f32.mrf.mxu0
        %435 = vdwg.mxu0
        %436 = vst [vmem:[%s231] sm:$0xff] %v362
        %437 = vst [vmem:[%s238] sm:$0xff] %v364
        %438 = vst [vmem:[%s245] sm:$0xff] %v433
        %s439 = sand.u32 %s81, 1
        %s440 = scalar_lea.sflag [#allocation4], %s439
        %s441 = sand.u32 %s81, 1
        %s442 = smul.addr %s441, 8
        %s443 = scalar_lea.vmem [#allocation7], %s442
        %s444 = sand.u32 %s26, 1
        %s445 = scalar_lea.sflag [#allocation9], %s444
        %s446 = sand.u32 %s107, 1
        %s447 = smul.addr %s446, 8
        %s448 = scalar_lea.vmem [#allocation8], %s447
        %s449 = sand.u32 %s26, 1
        %s450 = scalar_lea.sflag [#allocation9], %s449
        %s451 = sand.u32 %s133, 1
        %s452 = smul.addr %s451, 8
        %s453 = scalar_lea.vmem [#allocation10], %s452
        // Predicated region
        $region37: #{tpu_custom_call.1} parent=27 // pred_check
          %p454 = pneg %p91
        $region38: #{tpu_custom_call.1} parent=27 // pred_check_branch
          %456 = sbr.rel (%p454) target = $region40
        $region39: #{tpu_custom_call.1} parent=27 // pred_region
          %s458 = ssub.s32 128, 128
          %459 = vsyncadd %s440, %s458
          %s460 = smul.addr %s26, 128
          %s461 = scalar_lea.hbm %s2, %s460
          %s463 = sshll.u32 %s443, 4
          %s464 = int_to_ptr.vmem [resolvable:$true] %s463
          %466 = dma.vmem_to_hbm [thread:$0]  %s464, 128, %s461, %s440
        $region40: #{tpu_custom_call.1} parent=27 // pred_fallthru
          _
        // Predicated region
        $region41: #{tpu_custom_call.1} parent=27 // pred_check
          %p467 = pneg %p117
        $region42: #{tpu_custom_call.1} parent=27 // pred_check_branch
          %469 = sbr.rel (%p467) target = $region44
        $region43: #{tpu_custom_call.1} parent=27 // pred_region
          %s471 = ssub.s32 128, 128
          %472 = vsyncadd %s445, %s471
          %s473 = smul.addr %s26, 128
          %s474 = scalar_lea.hbm %s3, %s473
          %s476 = sshll.u32 %s448, 4
          %s477 = int_to_ptr.vmem [resolvable:$true] %s476
          %479 = dma.vmem_to_hbm [thread:$0]  %s477, 128, %s474, %s445
        $region44: #{tpu_custom_call.1} parent=27 // pred_fallthru
          _
        // Predicated region
        $region45: #{tpu_custom_call.1} parent=27 // pred_check
          %p480 = pneg %p143
        $region46: #{tpu_custom_call.1} parent=27 // pred_check_branch
          %482 = sbr.rel (%p480) target = $region48
        $region47: #{tpu_custom_call.1} parent=27 // pred_region
          %s484 = ssub.s32 128, 128
          %485 = vsyncadd %s450, %s484
          %s486 = smul.addr %s26, 128
          %s487 = scalar_lea.hbm %s4, %s486
          %s489 = sshll.u32 %s453, 4
          %s490 = int_to_ptr.vmem [resolvable:$true] %s489
          %492 = dma.vmem_to_hbm [thread:$0]  %s490, 128, %s487, %s450
        $region48: #{tpu_custom_call.1} parent=27 // pred_fallthru
          _
      $region28: #{tpu_custom_call.1} parent=5 // pred_fallthru
        _
      %p493 = scmp.le.s32.totalorder 2, %s21
      // Predicated region
      $region49: #{tpu_custom_call.1} parent=5 // pred_check
        %p494 = pneg %p493
      $region50: #{tpu_custom_call.1} parent=5 // pred_check_branch
        %496 = sbr.rel (%p494) target = $region52
      $region51: #{tpu_custom_call.1} parent=5 // pred_region
        %s497 = ssub.s32 %s21, 2
        // Predicated region
        $region53: #{tpu_custom_call.1} parent=51 // pred_check
          %p498 = pneg %p97
        $region54: #{tpu_custom_call.1} parent=51 // pred_check_branch
          %500 = sbr.rel (%p498) target = $region56
        $region55: #{tpu_custom_call.1} parent=51 // pred_region
          %s501 = sand.u32 %s82, 1
          %s502 = scalar_lea.sflag [#allocation4], %s501
          %s503 = sand.u32 %s82, 1
          %s504 = smul.addr %s503, 8
          %s505 = scalar_lea.vmem [#allocation7], %s504
          %506 = dma.done %s502, 128
        $region56: #{tpu_custom_call.1} parent=51 // pred_fallthru
          _
        // Predicated region
        $region57: #{tpu_custom_call.1} parent=51 // pred_check
          %p507 = pneg %p123
        $region58: #{tpu_custom_call.1} parent=51 // pred_check_branch
          %509 = sbr.rel (%p507) target = $region60
        $region59: #{tpu_custom_call.1} parent=51 // pred_region
          %s510 = sand.u32 %s27, 1
          %s511 = scalar_lea.sflag [#allocation9], %s510
          %s512 = sand.u32 %s108, 1
          %s513 = smul.addr %s512, 8
          %s514 = scalar_lea.vmem [#allocation8], %s513
          %515 = dma.done %s511, 128
        $region60: #{tpu_custom_call.1} parent=51 // pred_fallthru
          _
        // Predicated region
        $region61: #{tpu_custom_call.1} parent=51 // pred_check
          %p516 = pneg %p149
        $region62: #{tpu_custom_call.1} parent=51 // pred_check_branch
          %518 = sbr.rel (%p516) target = $region64
        $region63: #{tpu_custom_call.1} parent=51 // pred_region
          %s519 = sand.u32 %s27, 1
          %s520 = scalar_lea.sflag [#allocation9], %s519
          %s521 = sand.u32 %s134, 1
          %s522 = smul.addr %s521, 8
          %s523 = scalar_lea.vmem [#allocation10], %s522
          %524 = dma.done %s520, 128
        $region64: #{tpu_custom_call.1} parent=51 // pred_fallthru
          _
      $region52: #{tpu_custom_call.1} parent=5 // pred_fallthru
        _
    $region6: #{tpu_custom_call.1} parent=1 // loop_footer
      %s25 = sadd.s32 1, %s21
    $region7: #{tpu_custom_call.1} parent=1 // loop_footer_branch
      %20 = sbr.rel target = $region3
    $region8: #{tpu_custom_call.1} parent=1 // loop_exit
      _
    %525 = vsyncpa [#allocation3], 1
    %s526 = scalar_lea.sflag [#allocation3], 1
    %527 = vsyncpa %s526, 1
    %528 = vsyncpa [#allocation6], 1
    %529 = vsyncpa [#allocation4], 1
    %s530 = scalar_lea.sflag [#allocation4], 1
    %531 = vsyncpa %s530, 1
    %532 = vsyncpa [#allocation9], 1
    %s533 = scalar_lea.sflag [#allocation9], 1
    %534 = vsyncpa %s533, 1

</llo_original>
